<compile_context>
chip_gen: v6e
topology: v6e:2x2x1
jax: 0.10.0
libtpu: 0.0.40
codegen_flags: <defaults>
</compile_context>

<pallas_src>
import jax
import jax.numpy as jnp
from jax.experimental import pallas as pl
from jax.experimental.pallas import tpu as pltpu

_LANE = 128
# Gridless threshold: 4096 rows x 128 lanes x 4 B = 2 MiB per array, so even
# 3 arrays fit trivially in VMEM on v5e/v6e/v7x with no pipelining needed.
_MAX_GRIDLESS_ROWS = 4096
# Row-block candidates for the (rarely used) large-shape gridded path.  Each
# block stays <= 1 MiB/array (2048*128*4 B), leaving ample headroom under
# v7x's 32 MiB default scoped VMEM with 3 arrays x 2 pipeline buffers live.
_GRID_BLOCK_ROW_CANDIDATES = (2048, 1024, 512, 256, 128, 64, 32, 16, 8)


def _add_kernel(a_ref, b_ref, o_ref):
    o_ref[...] = a_ref[...] + b_ref[...]


def _pallas_add_2d(a2, b2, rows, block_rows):
    """Elementwise add on a lane-dense (rows, 128) slab."""
    flat_shape = (rows, _LANE)
    n_elems = rows * _LANE
    itemsize = jnp.dtype(a2.dtype).itemsize
    cost = pl.CostEstimate(
        flops=n_elems,
        transcendentals=0,
        bytes_accessed=3 * n_elems * itemsize,
    )

    if block_rows is None:
        # Gridless single-block path (the module's shape lands here).
        return pl.pallas_call(
            _add_kernel,
            out_shape=jax.ShapeDtypeStruct(flat_shape, a2.dtype),
            in_specs=[
                pl.BlockSpec(flat_shape, lambda: (0, 0)),
                pl.BlockSpec(flat_shape, lambda: (0, 0)),
            ],
            out_specs=pl.BlockSpec(flat_shape, lambda: (0, 0)),
            cost_estimate=cost,
        )(a2, b2)

    # Gridded guard path for large residual tensors: 1-D grid over rows,
    # row axis "parallel" so megacore chips (v7x) shard the grid.
    spec = pl.BlockSpec((block_rows, _LANE), lambda i: (i, 0))
    return pl.pallas_call(
        _add_kernel,
        out_shape=jax.ShapeDtypeStruct(flat_shape, a2.dtype),
        grid=(rows // block_rows,),
        in_specs=[spec, spec],
        out_specs=spec,
        compiler_params=pltpu.CompilerParams(
            dimension_semantics=("parallel",)),
        cost_estimate=cost,
    )(a2, b2)


@jax.jit
def pallas_add(x225, x210):
    """M.forward: x226 = operator.add(x225, x210)."""
    assert x225.shape == x210.shape
    assert x225.dtype == x210.dtype
    orig_shape = x225.shape
    n_elems = x225.size

    if n_elems % _LANE != 0:
        # Non-lane-aligned: plain XLA fused add beats a pad/slice sandwich
        # around a launch-bound custom call.
        return x225 + x210

    rows = n_elems // _LANE

    if rows <= _MAX_GRIDLESS_ROWS:
        block_rows = None
    else:
        block_rows = next(
            (c for c in _GRID_BLOCK_ROW_CANDIDATES if rows % c == 0), None)
        if block_rows is None:
            # No clean row blocking; the op is pure HBM traffic, so let XLA
            # handle it rather than building a ragged grid.
            return x225 + x210

    a2 = x225.reshape(rows, _LANE)
    b2 = x210.reshape(rows, _LANE)
    out = _pallas_add_2d(a2, b2, rows, block_rows)
    return out.reshape(orig_shape)


if __name__ == "__main__":
    key = jax.random.PRNGKey(0)
    k1, k2, k3, k4, k5, k6 = jax.random.split(key, 6)

    # 1) Module's shape: [1, 128, 14, 14] -> gridless (196, 128) slab.
    x210 = jax.random.normal(k1, (1, 128, 14, 14), dtype=jnp.float32)
    x225 = jax.random.normal(k2, (1, 128, 14, 14), dtype=jnp.float32)
    ref = x225 + x210
    y = pallas_add(x225, x210)
    jax.block_until_ready(y)
    assert y.shape == ref.shape
    assert jnp.allclose(y, ref, atol=1e-6, rtol=1e-6)

    # 2) Non-lane-aligned shape -> XLA fallback path.
    a_odd = jax.random.normal(k3, (1, 3, 5, 7), dtype=jnp.float32)
    b_odd = jax.random.normal(k4, (1, 3, 5, 7), dtype=jnp.float32)
    ref_odd = a_odd + b_odd
    y_odd = pallas_add(a_odd, b_odd)
    jax.block_until_ready(y_odd)
    assert y_odd.shape == ref_odd.shape
    assert jnp.allclose(y_odd, ref_odd, atol=1e-6, rtol=1e-6)

    # 3) Larger lane-aligned shape -> gridded guard path (rows=4608, block=512).
    a_big = jax.random.normal(k5, (1, 64, 96, 96), dtype=jnp.float32)
    b_big = jax.random.normal(k6, (1, 64, 96, 96), dtype=jnp.float32)
    ref_big = a_big + b_big
    y_big = pallas_add(a_big, b_big)
    jax.block_until_ready(y_big)
    assert y_big.shape == ref_big.shape
    assert jnp.allclose(y_big, ref_big, atol=1e-6, rtol=1e-6)

    print("KERNEL_OK")
</pallas_src>

<mosaic_0001>
module attributes {stable_mosaic.version = 11 : i64} {
  func.func @_add_kernel(%arg0: memref<196x128xf32, #tpu.memory_space<vmem>>, %arg1: memref<196x128xf32, #tpu.memory_space<vmem>>, %arg2: memref<196x128xf32, #tpu.memory_space<vmem>>) attributes {dimension_semantics = [], scalar_prefetch = 0 : i64, scratch_operands = 0 : i64, tpu.core_type = #tpu.core_type<tc>} {
    %c0 = arith.constant 0 : index
    %c0_0 = arith.constant 0 : index
    %0 = vector.load %arg0[%c0, %c0_0] : memref<196x128xf32, #tpu.memory_space<vmem>>, vector<196x128xf32>
    %c0_1 = arith.constant 0 : index
    %c0_2 = arith.constant 0 : index
    %1 = vector.load %arg1[%c0_1, %c0_2] : memref<196x128xf32, #tpu.memory_space<vmem>>, vector<196x128xf32>
    %2 = arith.addf %0, %1 : vector<196x128xf32>
    %c0_3 = arith.constant 0 : index
    %c0_4 = arith.constant 0 : index
    %3 = vector.load %arg2[%c0_3, %c0_4] : memref<196x128xf32, #tpu.memory_space<vmem>>, vector<196x128xf32>
    tpu.vector_store %arg2[%c0_3, %c0_4], %2 {strides = array<i32>} : memref<196x128xf32, #tpu.memory_space<vmem>>, vector<196x128xf32>,
    return
  }
}

</mosaic_0001>

<llo_original>
// kernel: pallas_add.1
$region0: #{pallas_add.1}
  #allocation0 [shape = 'u32[]', space=smem, size = 0x4, offset = 0x4, fixed_abs, tag = 'smem constant byte address 0x4 - core index']
  #allocation1 [shape = 'u32[144,128]{1,0:T(1,128)}', space=vmem, size = 0x12000, scoped, tag = 'internal scratch']
  %s0 = inlined_call_operand.vmem [shape: f32[196,128], index: 0, kind: input, shape index: {}]
  %s1 = inlined_call_operand.vmem [shape: f32[196,128], index: 1, kind: input, shape index: {}]
  %s2 = inlined_call_operand.vmem [shape: f32[196,128], index: 2, kind: output, shape index: {}]
  %s3 = sld [smem:[#allocation0]]
  $region18: #{pallas_add.1} parent=0
    _
  %s5 = ssub.s32 1, %s3
  %s6 = scalar_select 0, %s5, %s3
  // Predicated region
  $region2: #{pallas_add.1} parent=0 // pred_check
    _
  $region3: #{pallas_add.1} parent=0 // pred_check_branch
    %8 = sbr.rel (0) target = $region5
  $region4: #{pallas_add.1} parent=0 // pred_region
    _
  $region5: #{pallas_add.1} parent=0 // pred_fallthru
    _
  // Predicated region
  $region6: #{pallas_add.1} parent=0 // pred_check
    _
  $region7: #{pallas_add.1} parent=0 // pred_check_branch
    %10 = sbr.rel (0) target = $region9
  $region8: #{pallas_add.1} parent=0 // pred_region
    _
  $region9: #{pallas_add.1} parent=0 // pred_fallthru
    _
  %v11 = vld [vmem:[%s0] sm:$0xff]
  %v12 = vld [vmem:[%s0 + $0x8] sm:$0xff]
  %v13 = vld [vmem:[%s0 + $0x10] sm:$0xff]
  %v14 = vld [vmem:[%s0 + $0x18] sm:$0xff]
  %v15 = vld [vmem:[%s0 + $0x20] sm:$0xff]
  %v16 = vld [vmem:[%s0 + $0x28] sm:$0xff]
  %v17 = vld [vmem:[%s0 + $0x30] sm:$0xff]
  %v18 = vld [vmem:[%s0 + $0x38] sm:$0xff]
  %v19 = vld [vmem:[%s0 + $0x40] sm:$0xff]
  %v20 = vld [vmem:[%s0 + $0x48] sm:$0xff]
  %v21 = vld [vmem:[%s0 + $0x50] sm:$0xff]
  %v22 = vld [vmem:[%s0 + $0x58] sm:$0xff]
  %v23 = vld [vmem:[%s0 + $0x60] sm:$0xff]
  %v24 = vld [vmem:[%s0 + $0x68] sm:$0xff]
  %v25 = vld [vmem:[%s0 + $0x70] sm:$0xff]
  %v26 = vld [vmem:[%s0 + $0x78] sm:$0xff]
  %v27 = vld [vmem:[%s0 + $0x80] sm:$0xff]
  %v28 = vld [vmem:[%s0 + $0x88] sm:$0xff]
  %v29 = vld [vmem:[%s0 + $0x90] sm:$0xff]
  %v30 = vld [vmem:[%s0 + $0x98] sm:$0xff]
  %v31 = vld [vmem:[%s0 + $0xa0] sm:$0xff]
  %v32 = vld [vmem:[%s0 + $0xa8] sm:$0xff]
  %v33 = vld [vmem:[%s0 + $0xb0] sm:$0xff]
  %v34 = vld [vmem:[%s0 + $0xb8] sm:$0xff]
  %v35 = vld [vmem:[%s0 + $0xc0] sm:$0xf]
  %v36 = vld [vmem:[%s1] sm:$0xff]
  %v37 = vld [vmem:[%s1 + $0x8] sm:$0xff]
  %v38 = vld [vmem:[%s1 + $0x10] sm:$0xff]
  %v39 = vld [vmem:[%s1 + $0x18] sm:$0xff]
  %v40 = vld [vmem:[%s1 + $0x20] sm:$0xff]
  %v41 = vld [vmem:[%s1 + $0x28] sm:$0xff]
  %v42 = vld [vmem:[%s1 + $0x30] sm:$0xff]
  %v43 = vld [vmem:[%s1 + $0x38] sm:$0xff]
  %v44 = vld [vmem:[%s1 + $0x40] sm:$0xff]
  %v45 = vld [vmem:[%s1 + $0x48] sm:$0xff]
  %v46 = vld [vmem:[%s1 + $0x50] sm:$0xff]
  %v47 = vld [vmem:[%s1 + $0x58] sm:$0xff]
  %v48 = vld [vmem:[%s1 + $0x60] sm:$0xff]
  %v49 = vld [vmem:[%s1 + $0x68] sm:$0xff]
  %v50 = vld [vmem:[%s1 + $0x70] sm:$0xff]
  %v51 = vld [vmem:[%s1 + $0x78] sm:$0xff]
  %v52 = vld [vmem:[%s1 + $0x80] sm:$0xff]
  %v53 = vld [vmem:[%s1 + $0x88] sm:$0xff]
  %v54 = vld [vmem:[%s1 + $0x90] sm:$0xff]
  %v55 = vld [vmem:[%s1 + $0x98] sm:$0xff]
  %v56 = vld [vmem:[%s1 + $0xa0] sm:$0xff]
  %v57 = vld [vmem:[%s1 + $0xa8] sm:$0xff]
  %v58 = vld [vmem:[%s1 + $0xb0] sm:$0xff]
  %v59 = vld [vmem:[%s1 + $0xb8] sm:$0xff]
  %v60 = vld [vmem:[%s1 + $0xc0] sm:$0xf]
  %v61 = vadd.f32 %v11, %v36
  %v62 = vadd.f32 %v12, %v37
  %v63 = vadd.f32 %v13, %v38
  %v64 = vadd.f32 %v14, %v39
  %v65 = vadd.f32 %v15, %v40
  %v66 = vadd.f32 %v16, %v41
  %v67 = vadd.f32 %v17, %v42
  %v68 = vadd.f32 %v18, %v43
  %v69 = vadd.f32 %v19, %v44
  %v70 = vadd.f32 %v20, %v45
  %v71 = vadd.f32 %v21, %v46
  %v72 = vadd.f32 %v22, %v47
  %v73 = vadd.f32 %v23, %v48
  %v74 = vadd.f32 %v24, %v49
  %v75 = vadd.f32 %v25, %v50
  %v76 = vadd.f32 %v26, %v51
  %v77 = vadd.f32 %v27, %v52
  %v78 = vadd.f32 %v28, %v53
  %v79 = vadd.f32 %v29, %v54
  %v80 = vadd.f32 %v30, %v55
  %v81 = vadd.f32 %v31, %v56
  %v82 = vadd.f32 %v32, %v57
  %v83 = vadd.f32 %v33, %v58
  %v84 = vadd.f32 %v34, %v59
  %v85 = vadd.f32 %v35, %v60
  %86 = vst [vmem:[%s2] sm:$0xff] %v61
  %87 = vst [vmem:[%s2 + $0x8] sm:$0xff] %v62
  %88 = vst [vmem:[%s2 + $0x10] sm:$0xff] %v63
  %89 = vst [vmem:[%s2 + $0x18] sm:$0xff] %v64
  %90 = vst [vmem:[%s2 + $0x20] sm:$0xff] %v65
  %91 = vst [vmem:[%s2 + $0x28] sm:$0xff] %v66
  %92 = vst [vmem:[%s2 + $0x30] sm:$0xff] %v67
  %93 = vst [vmem:[%s2 + $0x38] sm:$0xff] %v68
  %94 = vst [vmem:[%s2 + $0x40] sm:$0xff] %v69
  %95 = vst [vmem:[%s2 + $0x48] sm:$0xff] %v70
  %96 = vst [vmem:[%s2 + $0x50] sm:$0xff] %v71
  %97 = vst [vmem:[%s2 + $0x58] sm:$0xff] %v72
  %98 = vst [vmem:[%s2 + $0x60] sm:$0xff] %v73
  %99 = vst [vmem:[%s2 + $0x68] sm:$0xff] %v74
  %100 = vst [vmem:[%s2 + $0x70] sm:$0xff] %v75
  %101 = vst [vmem:[%s2 + $0x78] sm:$0xff] %v76
  %102 = vst [vmem:[%s2 + $0x80] sm:$0xff] %v77
  %103 = vst [vmem:[%s2 + $0x88] sm:$0xff] %v78
  %104 = vst [vmem:[%s2 + $0x90] sm:$0xff] %v79
  %105 = vst [vmem:[%s2 + $0x98] sm:$0xff] %v80
  %106 = vst [vmem:[%s2 + $0xa0] sm:$0xff] %v81
  %107 = vst [vmem:[%s2 + $0xa8] sm:$0xff] %v82
  %108 = vst [vmem:[%s2 + $0xb0] sm:$0xff] %v83
  %109 = vst [vmem:[%s2 + $0xb8] sm:$0xff] %v84
  %110 = vst [vmem:[%s2 + $0xc0] sm:$0xf] %v85
  // Predicated region
  $region10: #{pallas_add.1} parent=0 // pred_check
    _
  $region11: #{pallas_add.1} parent=0 // pred_check_branch
    %112 = sbr.rel (0) target = $region13
  $region12: #{pallas_add.1} parent=0 // pred_region
    _
  $region13: #{pallas_add.1} parent=0 // pred_fallthru
    _
  // Predicated region
  $region14: #{pallas_add.1} parent=0 // pred_check
    _
  $region15: #{pallas_add.1} parent=0 // pred_check_branch
    %114 = sbr.rel (0) target = $region17
  $region16: #{pallas_add.1} parent=0 // pred_region
    _
  $region17: #{pallas_add.1} parent=0 // pred_fallthru
    _

</llo_original>
